<compile_context>
chip_gen: v5e
topology: v5e:2x2
jax: 0.10.0
libtpu: 0.0.40
codegen_flags: <defaults>
</compile_context>

<pallas_src>
import functools
from dataclasses import dataclass

import jax
import jax.numpy as jnp
from jax.experimental import pallas as pl
from jax.experimental.pallas import tpu as pltpu


def _round_up(x, m):
    return (x + m - 1) // m * m


def _tpu_limits():
    """Best-effort trace-time hardware query with safe fallbacks."""
    vmem = 128 << 20   # v5e/v6e physical VMEM
    mxu = 128
    try:
        info = pltpu.get_tpu_info()
        vmem = int(getattr(info, "vmem_capacity_bytes", vmem))
        for name in ("mxu_contracting_size", "mxu_column_size", "mxu_size"):
            v = getattr(info, name, None)
            if v:
                mxu = int(v)
                break
    except Exception:
        pass
    return vmem, mxu


def _fused_mlp_kernel(x_ref, *args, num_layers, activation):
    """Fused MLP for one batch tile.

    args = (w0, b0, w1, b1, ..., w_{L-1}, b_{L-1}, o_ref)
      x_ref : (TB, F0p)        VMEM (double-buffered tile)
      w_l   : (F_lp, F_{l+1}p) VMEM (whole padded weight, single-buffered)
      b_l   : (1, F_{l+1}p)    VMEM
      o_ref : (TB, F_Lp)       VMEM
    Intermediate activations never touch HBM; only the final padded output
    slab is stored (lane-dense -> unmasked vst).
    """
    o_ref = args[2 * num_layers]
    h = x_ref[...]
    for l in range(num_layers):
        w_ref = args[2 * l]
        b_ref = args[2 * l + 1]
        # MXU matmul with f32 accumulation regardless of storage dtype.
        y = jnp.dot(h, w_ref[...], preferred_element_type=jnp.float32)
        y = y + b_ref[...].astype(jnp.float32)      # VPU
        if activation == "relu":
            y = jnp.maximum(y, 0.0)                 # VPU
        else:                                       # 'tanh'
            y = jnp.tanh(y)                         # EUP
        # Feed the next MXU pass with the narrow storage dtype (fast bf16 path
        # on v6e/v7x); the last layer stays f32 until the output cast.
        h = y.astype(w_ref.dtype) if l + 1 < num_layers else y
    o_ref[...] = h.astype(o_ref.dtype)


def _resident_spec(shape):
    """Grid-invariant VMEM operand: request single buffering (no pointless
    double-buffer for a constant index_map)."""
    index_map = lambda i: (0,) * len(shape)
    try:
        return pl.BlockSpec(shape, index_map, pipeline_mode=pl.Buffered(1))
    except Exception:
        return pl.BlockSpec(shape, index_map)


@dataclass
class PaddedMLP:
    wb: list      # [w0, b0, w1, b1, ...] padded, lane-dense, storage dtype
    dims: list    # true feature dims   [F0, F1, ..., FL]
    pdims: list   # padded feature dims
    dtype: object


def pad_params(params, dtype=None):
    """Pad (and optionally cast) parameters ONCE, outside the per-call path."""
    dims = [params[0][0].shape[0]] + [w.shape[1] for (w, _) in params]
    for l, (w, b) in enumerate(params):
        assert w.shape == (dims[l], dims[l + 1]) and b.shape == (dims[l + 1],)
    _, mxu = _tpu_limits()

    def align(d):
        # 128 lanes always; bump to 256 for very wide dims when the MXU is
        # 256-wide (v6e/v7x) so K tiles fill the systolic array.
        if mxu >= 256 and d >= 1024:
            return _round_up(d, 256)
        return _round_up(d, 128)

    pdims = [align(d) for d in dims]
    if dtype is None:
        dtype = params[0][0].dtype
    dtype = jnp.dtype(dtype)

    wb = []
    for l, (w, b) in enumerate(params):
        pin, pout = pdims[l], pdims[l + 1]
        w_pad = jnp.zeros((pin, pout), dtype).at[: dims[l], : dims[l + 1]].set(
            w.astype(dtype))
        b_pad = jnp.zeros((1, pout), dtype).at[0, : dims[l + 1]].set(b.astype(dtype))
        wb.extend([w_pad, b_pad])
    return PaddedMLP(wb=wb, dims=list(dims), pdims=list(pdims), dtype=dtype)


def mlp_forward(x, padded: PaddedMLP, *, activation="relu", batch_tile=None):
    """Equivalent of Model.forward: alternating Linear + activation, fused."""
    # Zero padding of rows/cols is mathematically inert only because
    # act(0) == 0 for relu and tanh; guard against activations that break it.
    assert activation in ("relu", "tanh"), f"unsupported activation {activation!r}"

    dims, pdims, dtype = padded.dims, padded.pdims, padded.dtype
    num_layers = len(dims) - 1
    B, F_in = x.shape
    assert F_in == dims[0], f"input features {F_in} != topology[0] {dims[0]}"

    itemsize = dtype.itemsize
    sublane = max(8, 32 // itemsize)          # 8 for f32, 16 for bf16
    B8 = _round_up(B, sublane)

    # ---- generation-aware VMEM budget (buffer-count-aware accounting) ------
    vmem_cap, _ = _tpu_limits()
    budget = (vmem_cap * 3) // 4              # ~48 MiB on v7x, ~96 MiB on v5e/v6e
    weight_bytes = sum(int(a.size) * a.dtype.itemsize for a in padded.wb)  # 1-buffered
    per_row = (2 * pdims[0] * itemsize        # double-buffered x tile
               + 2 * pdims[-1] * itemsize     # double-buffered out tile
               + 2 * max(pdims) * 4)          # live f32 intermediates (h, y)
    overhead = 2 << 20

    if batch_tile is None:
        avail = budget - weight_bytes - overhead
        if avail < per_row * sublane:
            # TODO(synk): stream oversized layers over out_features with a nested
            # pltpu.emit_pipeline instead of the all-weights-resident design.
            raise NotImplementedError(
                "padded weight stack too large for all-weights-resident VMEM design")
        batch_tile = min(avail // per_row, 2048, B8)
        batch_tile = max(sublane, (batch_tile // sublane) * sublane)
    else:
        batch_tile = max(sublane, _round_up(batch_tile, sublane))
        batch_tile = min(batch_tile, B8)

    # v7x megacore: for large batches keep the parallel grid length even so the
    # batch axis can shard across both TensorCores (no effect on v5e/v6e).
    if B8 >= 512:
        grid_len = -(-B8 // batch_tile)
        if grid_len % 2 == 1:
            batch_tile = _round_up(-(-B8 // (grid_len + 1)), sublane)

    B_pad = _round_up(B8, batch_tile)
    grid = (B_pad // batch_tile,)

    # ---- batch padding (features were pre-padded in pad_params) ------------
    x_pad = jnp.zeros((B_pad, pdims[0]), dtype).at[:B, :F_in].set(x.astype(dtype))

    in_specs = [pl.BlockSpec((batch_tile, pdims[0]), lambda i: (i, 0))]
    for l in range(num_layers):
        in_specs.append(_resident_spec((pdims[l], pdims[l + 1])))
        in_specs.append(_resident_spec((1, pdims[l + 1])))

    # ---- cost estimate + VMEM limit -----------------------------------------
    flops = sum(2 * B_pad * pdims[l] * pdims[l + 1] for l in range(num_layers))
    transcendentals = 0 if activation == "relu" else sum(
        B_pad * pdims[l + 1] for l in range(num_layers))
    bytes_accessed = (x_pad.size * itemsize + weight_bytes
                      + B_pad * pdims[-1] * itemsize)
    vmem_need = weight_bytes + batch_tile * per_row + overhead
    vmem_limit = int(min(max(int(vmem_need * 1.25), 16 << 20), budget))

    kernel = functools.partial(
        _fused_mlp_kernel, num_layers=num_layers, activation=activation)

    def _call(specs):
        return pl.pallas_call(
            kernel,
            out_shape=jax.ShapeDtypeStruct((B_pad, pdims[-1]), dtype),
            grid_spec=pltpu.PrefetchScalarGridSpec(
                num_scalar_prefetch=0,
                grid=grid,
                in_specs=specs,
                out_specs=pl.BlockSpec((batch_tile, pdims[-1]), lambda i: (i, 0)),
            ),
            compiler_params=pltpu.CompilerParams(
                dimension_semantics=("parallel",),
                vmem_limit_bytes=vmem_limit,
            ),
            cost_estimate=pl.CostEstimate(
                flops=flops,
                transcendentals=transcendentals,
                bytes_accessed=bytes_accessed,
            ),
        )(x_pad, *padded.wb)

    try:
        y_pad = _call(in_specs)
    except Exception:
        # Fallback: drop the single-buffer hint if this jax/Mosaic build
        # rejects pipeline_mode=Buffered(1).
        fallback = [pl.BlockSpec((batch_tile, pdims[0]), lambda i: (i, 0))]
        for l in range(num_layers):
            fallback.append(pl.BlockSpec((pdims[l], pdims[l + 1]), lambda i: (0, 0)))
            fallback.append(pl.BlockSpec((1, pdims[l + 1]), lambda i: (0, 0)))
        y_pad = _call(fallback)

    return y_pad[:B, : dims[-1]]


def init_mlp_params(key, topology, dtype=jnp.float32):
    """Deterministic parameter init mirroring nn.Linear shapes.
    Weights stored as (in, out) (transposed vs. PyTorch's (out, in))."""
    params = []
    for n_in, n_out in zip(topology[:-1], topology[1:]):
        key, kw, kb = jax.random.split(key, 3)
        bound = 1.0 / jnp.sqrt(n_in)
        w = jax.random.uniform(kw, (n_in, n_out), dtype, -bound, bound)
        b = jax.random.uniform(kb, (n_out,), dtype, -bound, bound)
        params.append((w, b))
    return params


def mlp_forward_ref(x, params, *, activation="relu"):
    """Pure-JAX reference for correctness checking (f32)."""
    h = x.astype(jnp.float32)
    for w, b in params:
        h = h @ w.astype(jnp.float32) + b.astype(jnp.float32)
        h = jnp.maximum(h, 0.0) if activation == "relu" else jnp.tanh(h)
    return h


if __name__ == "__main__":
    key = jax.random.PRNGKey(0)
    # params.model.topology analogue (small): 32 -> 64 -> 64 -> 16
    topology = [32, 64, 64, 16]

    k_x, k_p, k_x2 = jax.random.split(key, 3)
    params = init_mlp_params(k_p, topology)
    padded_f32 = pad_params(params, jnp.float32)      # pad once, reuse per call

    # relu path (default activation in the spec), batch = 8
    x = jax.random.normal(k_x, (8, topology[0]), jnp.float32)
    y = jax.block_until_ready(mlp_forward(x, padded_f32, activation="relu"))
    y_ref = mlp_forward_ref(x, params, activation="relu")
    assert y.shape == (8, topology[-1])
    assert jnp.allclose(y, y_ref, atol=2e-5, rtol=2e-5), "relu mismatch vs reference"

    # tanh path + non-multiple-of-8 batch with a multi-step parallel grid.
    x2 = jax.random.normal(k_x2, (20, topology[0]), jnp.float32)
    y2 = jax.block_until_ready(
        mlp_forward(x2, padded_f32, activation="tanh", batch_tile=8))
    y2_ref = mlp_forward_ref(x2, params, activation="tanh")
    assert y2.shape == (20, topology[-1])
    assert jnp.allclose(y2, y2_ref, atol=2e-5, rtol=2e-5), "tanh mismatch vs reference"

    # bf16 storage path (fast bf16 MXU pipe, f32 accumulation in the kernel).
    padded_bf16 = pad_params(params, jnp.bfloat16)
    y3 = jax.block_until_ready(
        mlp_forward(x2.astype(jnp.bfloat16), padded_bf16, activation="tanh"))
    y3_f32 = y3.astype(jnp.float32)
    assert y3.shape == (20, topology[-1])
    assert bool(jnp.all(jnp.isfinite(y3_f32)))
    assert jnp.allclose(y3_f32, y2_ref, atol=5e-2, rtol=5e-2), "bf16 mismatch vs reference"

    # TODO(synk): loss/optimizer (CrossEntropyLoss, SGD/Adam/LBFGS) and the
    # training/eval loops are host-side training utilities, not part of forward().
    print("KERNEL_OK")
</pallas_src>

<mosaic_0001>
module attributes {stable_mosaic.version = 11 : i64} {
  func.func @_fused_mlp_kernel(%arg0: i32, %arg1: memref<8x128xf32, #tpu.memory_space<vmem>>, %arg2: memref<128x128xf32, #tpu.memory_space<vmem>>, %arg3: memref<1x128xf32, #tpu.memory_space<vmem>>, %arg4: memref<128x128xf32, #tpu.memory_space<vmem>>, %arg5: memref<1x128xf32, #tpu.memory_space<vmem>>, %arg6: memref<128x128xf32, #tpu.memory_space<vmem>>, %arg7: memref<1x128xf32, #tpu.memory_space<vmem>>, %arg8: memref<8x128xf32, #tpu.memory_space<vmem>>) attributes {dimension_semantics = [#tpu.dimension_semantics<parallel>], iteration_bounds = array<i64: 1>, scalar_prefetch = 0 : i64, scratch_operands = 0 : i64, tpu.core_type = #tpu.core_type<tc>, window_params = [{transform_indices = @transform_0, window_bounds = array<i64: 8, 128>}, {pipeline_mode = #tpu.pipeline_mode<synchronous>, transform_indices = @transform_1, window_bounds = array<i64: 128, 128>}, {pipeline_mode = #tpu.pipeline_mode<synchronous>, transform_indices = @transform_2, window_bounds = array<i64: 1, 128>}, {pipeline_mode = #tpu.pipeline_mode<synchronous>, transform_indices = @transform_3, window_bounds = array<i64: 128, 128>}, {pipeline_mode = #tpu.pipeline_mode<synchronous>, transform_indices = @transform_4, window_bounds = array<i64: 1, 128>}, {pipeline_mode = #tpu.pipeline_mode<synchronous>, transform_indices = @transform_5, window_bounds = array<i64: 128, 128>}, {pipeline_mode = #tpu.pipeline_mode<synchronous>, transform_indices = @transform_6, window_bounds = array<i64: 1, 128>}, {transform_indices = @transform_7, window_bounds = array<i64: 8, 128>}]} {
    %c0 = arith.constant 0 : index
    %c0_0 = arith.constant 0 : index
    %0 = vector.load %arg1[%c0, %c0_0] : memref<8x128xf32, #tpu.memory_space<vmem>>, vector<8x128xf32>
    %c0_1 = arith.constant 0 : index
    %c0_2 = arith.constant 0 : index
    %1 = vector.load %arg2[%c0_1, %c0_2] : memref<128x128xf32, #tpu.memory_space<vmem>>, vector<128x128xf32>
    %cst = arith.constant dense<0.000000e+00> : vector<8x128xf32>
    %2 = tpu.matmul %0, %1, %cst {dimension_numbers = #tpu.dot_dimension_numbers<[1], [0], [0], [1], [0, 0, 1, 1], [], []>} : vector<8x128xf32>, vector<128x128xf32>, vector<8x128xf32> -> vector<8x128xf32>
    %c0_3 = arith.constant 0 : index
    %c0_4 = arith.constant 0 : index
    %3 = vector.load %arg3[%c0_3, %c0_4] : memref<1x128xf32, #tpu.memory_space<vmem>>, vector<1x128xf32>
    %4 = vector.broadcast %3 : vector<1x128xf32> to vector<8x128xf32>
    %5 = arith.addf %2, %4 : vector<8x128xf32>
    %cst_5 = arith.constant 0.000000e+00 : f32
    %6 = vector.broadcast %cst_5 : f32 to vector<8x128xf32>
    %7 = arith.maximumf %5, %6 : vector<8x128xf32>
    %c0_6 = arith.constant 0 : index
    %c0_7 = arith.constant 0 : index
    %8 = vector.load %arg4[%c0_6, %c0_7] : memref<128x128xf32, #tpu.memory_space<vmem>>, vector<128x128xf32>
    %cst_8 = arith.constant dense<0.000000e+00> : vector<8x128xf32>
    %9 = tpu.matmul %7, %8, %cst_8 {dimension_numbers = #tpu.dot_dimension_numbers<[1], [0], [0], [1], [0, 0, 1, 1], [], []>} : vector<8x128xf32>, vector<128x128xf32>, vector<8x128xf32> -> vector<8x128xf32>
    %c0_9 = arith.constant 0 : index
    %c0_10 = arith.constant 0 : index
    %10 = vector.load %arg5[%c0_9, %c0_10] : memref<1x128xf32, #tpu.memory_space<vmem>>, vector<1x128xf32>
    %11 = vector.broadcast %10 : vector<1x128xf32> to vector<8x128xf32>
    %12 = arith.addf %9, %11 : vector<8x128xf32>
    %cst_11 = arith.constant 0.000000e+00 : f32
    %13 = vector.broadcast %cst_11 : f32 to vector<8x128xf32>
    %14 = arith.maximumf %12, %13 : vector<8x128xf32>
    %c0_12 = arith.constant 0 : index
    %c0_13 = arith.constant 0 : index
    %15 = vector.load %arg6[%c0_12, %c0_13] : memref<128x128xf32, #tpu.memory_space<vmem>>, vector<128x128xf32>
    %cst_14 = arith.constant dense<0.000000e+00> : vector<8x128xf32>
    %16 = tpu.matmul %14, %15, %cst_14 {dimension_numbers = #tpu.dot_dimension_numbers<[1], [0], [0], [1], [0, 0, 1, 1], [], []>} : vector<8x128xf32>, vector<128x128xf32>, vector<8x128xf32> -> vector<8x128xf32>
    %c0_15 = arith.constant 0 : index
    %c0_16 = arith.constant 0 : index
    %17 = vector.load %arg7[%c0_15, %c0_16] : memref<1x128xf32, #tpu.memory_space<vmem>>, vector<1x128xf32>
    %18 = vector.broadcast %17 : vector<1x128xf32> to vector<8x128xf32>
    %19 = arith.addf %16, %18 : vector<8x128xf32>
    %cst_17 = arith.constant 0.000000e+00 : f32
    %20 = vector.broadcast %cst_17 : f32 to vector<8x128xf32>
    %21 = arith.maximumf %19, %20 : vector<8x128xf32>
    %c0_18 = arith.constant 0 : index
    %c0_19 = arith.constant 0 : index
    %22 = vector.load %arg8[%c0_18, %c0_19] : memref<8x128xf32, #tpu.memory_space<vmem>>, vector<8x128xf32>
    tpu.vector_store %arg8[%c0_18, %c0_19], %21 {strides = array<i32>} : memref<8x128xf32, #tpu.memory_space<vmem>>, vector<8x128xf32>,
    return
  }
  func.func @transform_0(%arg0: i32) -> (i32, i32) {
    %c0_i32 = arith.constant 0 : i32
    %c0_i32_0 = arith.constant 0 : i32
    return %arg0, %c0_i32 : i32, i32
  }
  func.func @transform_1(%arg0: i32) -> (i32, i32) {
    %c0_i32 = arith.constant 0 : i32
    %c0_i32_0 = arith.constant 0 : i32
    %c0_i32_1 = arith.constant 0 : i32
    return %c0_i32, %c0_i32_0 : i32, i32
  }
  func.func @transform_2(%arg0: i32) -> (i32, i32) {
    %c0_i32 = arith.constant 0 : i32
    %c0_i32_0 = arith.constant 0 : i32
    %c0_i32_1 = arith.constant 0 : i32
    return %c0_i32, %c0_i32_0 : i32, i32
  }
  func.func @transform_3(%arg0: i32) -> (i32, i32) {
    %c0_i32 = arith.constant 0 : i32
    %c0_i32_0 = arith.constant 0 : i32
    %c0_i32_1 = arith.constant 0 : i32
    return %c0_i32, %c0_i32_0 : i32, i32
  }
  func.func @transform_4(%arg0: i32) -> (i32, i32) {
    %c0_i32 = arith.constant 0 : i32
    %c0_i32_0 = arith.constant 0 : i32
    %c0_i32_1 = arith.constant 0 : i32
    return %c0_i32, %c0_i32_0 : i32, i32
  }
  func.func @transform_5(%arg0: i32) -> (i32, i32) {
    %c0_i32 = arith.constant 0 : i32
    %c0_i32_0 = arith.constant 0 : i32
    %c0_i32_1 = arith.constant 0 : i32
    return %c0_i32, %c0_i32_0 : i32, i32
  }
  func.func @transform_6(%arg0: i32) -> (i32, i32) {
    %c0_i32 = arith.constant 0 : i32
    %c0_i32_0 = arith.constant 0 : i32
    %c0_i32_1 = arith.constant 0 : i32
    return %c0_i32, %c0_i32_0 : i32, i32
  }
  func.func @transform_7(%arg0: i32) -> (i32, i32) {
    %c0_i32 = arith.constant 0 : i32
    %c0_i32_0 = arith.constant 0 : i32
    return %arg0, %c0_i32 : i32, i32
  }
}

module attributes {stable_mosaic.version = 11 : i64} {
  func.func @_fused_mlp_kernel(%arg0: i32, %arg1: memref<8x128xf32, #tpu.memory_space<vmem>>, %arg2: memref<128x128xf32, #tpu.memory_space<vmem>>, %arg3: memref<1x128xf32, #tpu.memory_space<vmem>>, %arg4: memref<128x128xf32, #tpu.memory_space<vmem>>, %arg5: memref<1x128xf32, #tpu.memory_space<vmem>>, %arg6: memref<128x128xf32, #tpu.memory_space<vmem>>, %arg7: memref<1x128xf32, #tpu.memory_space<vmem>>, %arg8: memref<8x128xf32, #tpu.memory_space<vmem>>) attributes {dimension_semantics = [#tpu.dimension_semantics<parallel>], iteration_bounds = array<i64: 1>, scalar_prefetch = 0 : i64, scratch_operands = 0 : i64, tpu.core_type = #tpu.core_type<tc>, window_params = [{transform_indices = @transform_0, window_bounds = array<i64: 8, 128>}, {pipeline_mode = #tpu.pipeline_mode<synchronous>, transform_indices = @transform_1, window_bounds = array<i64: 128, 128>}, {pipeline_mode = #tpu.pipeline_mode<synchronous>, transform_indices = @transform_2, window_bounds = array<i64: 1, 128>}, {pipeline_mode = #tpu.pipeline_mode<synchronous>, transform_indices = @transform_3, window_bounds = array<i64: 128, 128>}, {pipeline_mode = #tpu.pipeline_mode<synchronous>, transform_indices = @transform_4, window_bounds = array<i64: 1, 128>}, {pipeline_mode = #tpu.pipeline_mode<synchronous>, transform_indices = @transform_5, window_bounds = array<i64: 128, 128>}, {pipeline_mode = #tpu.pipeline_mode<synchronous>, transform_indices = @transform_6, window_bounds = array<i64: 1, 128>}, {transform_indices = @transform_7, window_bounds = array<i64: 8, 128>}]} {
    %c0 = arith.constant 0 : index
    %c0_0 = arith.constant 0 : index
    %0 = vector.load %arg1[%c0, %c0_0] : memref<8x128xf32, #tpu.memory_space<vmem>>, vector<8x128xf32>
    %c0_1 = arith.constant 0 : index
    %c0_2 = arith.constant 0 : index
    %1 = vector.load %arg2[%c0_1, %c0_2] : memref<128x128xf32, #tpu.memory_space<vmem>>, vector<128x128xf32>
    %cst = arith.constant dense<0.000000e+00> : vector<8x128xf32>
    %2 = tpu.matmul %0, %1, %cst {dimension_numbers = #tpu.dot_dimension_numbers<[1], [0], [0], [1], [0, 0, 1, 1], [], []>} : vector<8x128xf32>, vector<128x128xf32>, vector<8x128xf32> -> vector<8x128xf32>
    %c0_3 = arith.constant 0 : index
    %c0_4 = arith.constant 0 : index
    %3 = vector.load %arg3[%c0_3, %c0_4] : memref<1x128xf32, #tpu.memory_space<vmem>>, vector<1x128xf32>
    %4 = vector.broadcast %3 : vector<1x128xf32> to vector<8x128xf32>
    %5 = arith.addf %2, %4 : vector<8x128xf32>
    %cst_5 = arith.constant 0.000000e+00 : f32
    %6 = vector.broadcast %cst_5 : f32 to vector<8x128xf32>
    %7 = arith.maximumf %5, %6 : vector<8x128xf32>
    %c0_6 = arith.constant 0 : index
    %c0_7 = arith.constant 0 : index
    %8 = vector.load %arg4[%c0_6, %c0_7] : memref<128x128xf32, #tpu.memory_space<vmem>>, vector<128x128xf32>
    %cst_8 = arith.constant dense<0.000000e+00> : vector<8x128xf32>
    %9 = tpu.matmul %7, %8, %cst_8 {dimension_numbers = #tpu.dot_dimension_numbers<[1], [0], [0], [1], [0, 0, 1, 1], [], []>} : vector<8x128xf32>, vector<128x128xf32>, vector<8x128xf32> -> vector<8x128xf32>
    %c0_9 = arith.constant 0 : index
    %c0_10 = arith.constant 0 : index
    %10 = vector.load %arg5[%c0_9, %c0_10] : memref<1x128xf32, #tpu.memory_space<vmem>>, vector<1x128xf32>
    %11 = vector.broadcast %10 : vector<1x128xf32> to vector<8x128xf32>
    %12 = arith.addf %9, %11 : vector<8x128xf32>
    %cst_11 = arith.constant 0.000000e+00 : f32
    %13 = vector.broadcast %cst_11 : f32 to vector<8x128xf32>
    %14 = arith.maximumf %12, %13 : vector<8x128xf32>
    %c0_12 = arith.constant 0 : index
    %c0_13 = arith.constant 0 : index
    %15 = vector.load %arg6[%c0_12, %c0_13] : memref<128x128xf32, #tpu.memory_space<vmem>>, vector<128x128xf32>
    %cst_14 = arith.constant dense<0.000000e+00> : vector<8x128xf32>
    %16 = tpu.matmul %14, %15, %cst_14 {dimension_numbers = #tpu.dot_dimension_numbers<[1], [0], [0], [1], [0, 0, 1, 1], [], []>} : vector<8x128xf32>, vector<128x128xf32>, vector<8x128xf32> -> vector<8x128xf32>
    %c0_15 = arith.constant 0 : index
    %c0_16 = arith.constant 0 : index
    %17 = vector.load %arg7[%c0_15, %c0_16] : memref<1x128xf32, #tpu.memory_space<vmem>>, vector<1x128xf32>
    %18 = vector.broadcast %17 : vector<1x128xf32> to vector<8x128xf32>
    %19 = arith.addf %16, %18 : vector<8x128xf32>
    %cst_17 = arith.constant 0.000000e+00 : f32
    %20 = vector.broadcast %cst_17 : f32 to vector<8x128xf32>
    %21 = arith.maximumf %19, %20 : vector<8x128xf32>
    %c0_18 = arith.constant 0 : index
    %c0_19 = arith.constant 0 : index
    %22 = vector.load %arg8[%c0_18, %c0_19] : memref<8x128xf32, #tpu.memory_space<vmem>>, vector<8x128xf32>
    tpu.vector_store %arg8[%c0_18, %c0_19], %21 {strides = array<i32>} : memref<8x128xf32, #tpu.memory_space<vmem>>, vector<8x128xf32>,
    return
  }
  func.func @transform_0(%arg0: i32) -> (i32, i32) {
    %c0_i32 = arith.constant 0 : i32
    %c0_i32_0 = arith.constant 0 : i32
    return %arg0, %c0_i32 : i32, i32
  }
  func.func @transform_1(%arg0: i32) -> (i32, i32) {
    %c0_i32 = arith.constant 0 : i32
    %c0_i32_0 = arith.constant 0 : i32
    %c0_i32_1 = arith.constant 0 : i32
    return %c0_i32, %c0_i32_0 : i32, i32
  }
  func.func @transform_2(%arg0: i32) -> (i32, i32) {
    %c0_i32 = arith.constant 0 : i32
    %c0_i32_0 = arith.constant 0 : i32
    %c0_i32_1 = arith.constant 0 : i32
    return %c0_i32, %c0_i32_0 : i32, i32
  }
  func.func @transform_3(%arg0: i32) -> (i32, i32) {
    %c0_i32 = arith.constant 0 : i32
    %c0_i32_0 = arith.constant 0 : i32
    %c0_i32_1 = arith.constant 0 : i32
    return %c0_i32, %c0_i32_0 : i32, i32
  }
  func.func @transform_4(%arg0: i32) -> (i32, i32) {
    %c0_i32 = arith.constant 0 : i32
    %c0_i32_0 = arith.constant 0 : i32
    %c0_i32_1 = arith.constant 0 : i32
    return %c0_i32, %c0_i32_0 : i32, i32
  }
  func.func @transform_5(%arg0: i32) -> (i32, i32) {
    %c0_i32 = arith.constant 0 : i32
    %c0_i32_0 = arith.constant 0 : i32
    %c0_i32_1 = arith.constant 0 : i32
    return %c0_i32, %c0_i32_0 : i32, i32
  }
  func.func @transform_6(%arg0: i32) -> (i32, i32) {
    %c0_i32 = arith.constant 0 : i32
    %c0_i32_0 = arith.constant 0 : i32
    %c0_i32_1 = arith.constant 0 : i32
    return %c0_i32, %c0_i32_0 : i32, i32
  }
  func.func @transform_7(%arg0: i32) -> (i32, i32) {
    %c0_i32 = arith.constant 0 : i32
    %c0_i32_0 = arith.constant 0 : i32
    return %arg0, %c0_i32 : i32, i32
  }
}

</mosaic_0001>

<llo_original>
// kernel: tpu_custom_call.1
$region0: #{tpu_custom_call.1}
  #allocation0 [shape = 'u32[]', space=smem, size = 0x4, offset = 0x4, fixed_abs, tag = 'smem constant byte address 0x4 - core index']
  #allocation1 [shape = 'u32[72,128]{1,0:T(1,128)}', space=vmem, size = 0x9000, scoped, tag = 'internal scratch']
  %s0 = inlined_call_operand.hbm [shape: f32[8,128], index: 0, kind: input, shape index: {}]
  %s1 = inlined_call_operand.hbm [shape: f32[128,128], index: 1, kind: input, shape index: {}]
  %s2 = inlined_call_operand.vmem [shape: f32[1,128], index: 2, kind: input, shape index: {}]
  %s3 = inlined_call_operand.hbm [shape: f32[128,128], index: 3, kind: input, shape index: {}]
  %s4 = inlined_call_operand.vmem [shape: f32[1,128], index: 4, kind: input, shape index: {}]
  %s5 = inlined_call_operand.hbm [shape: f32[128,128], index: 5, kind: input, shape index: {}]
  %s6 = inlined_call_operand.vmem [shape: f32[1,128], index: 6, kind: input, shape index: {}]
  %s7 = inlined_call_operand.hbm [shape: f32[8,128], index: 7, kind: output, shape index: {}]
  %s8 = sld [smem:[#allocation0]]
  $region54: #{tpu_custom_call.1} parent=0
    _
  %s10 = ssub.s32 1, %s8
  %s11 = scalar_select 0, %s10, %s8
  $region1: #{tpu_custom_call.1} parent=0
    #allocation2 [shape = 'u8[4096]{0}', space=vmem, size = 0x1000, scoped, tag = 'input window, operand 0, single buffered']
    #allocation3 [shape = 's32[1]{0}', space=sflag, size = 0x4, scoped, tag = 'scoped memory for tpu_custom_call.1']
    #allocation4 [shape = 's32[1]{0}', space=sflag, size = 0x4, scoped, tag = 'scoped memory for tpu_custom_call.1']
    #allocation5 [shape = 'u8[65536]{0}', space=vmem, size = 0x10000, scoped, tag = 'input window, operand 1, single buffered']
    #allocation6 [shape = 's32[1]{0}', space=sflag, size = 0x4, scoped, tag = 'scoped memory for tpu_custom_call.1']
    #allocation7 [shape = 'u8[65536]{0}', space=vmem, size = 0x10000, scoped, tag = 'input window, operand 3, single buffered']
    #allocation8 [shape = 'u8[65536]{0}', space=vmem, size = 0x10000, scoped, tag = 'input window, operand 5, single buffered']
    #allocation9 [shape = 's32[1]{0}', space=sflag, size = 0x4, scoped, tag = 'scoped memory for tpu_custom_call.1']
    #allocation10 [shape = 'u8[4096]{0}', space=vmem, size = 0x1000, scoped, tag = 'output window, operand 0, single buffered']
    %12 = vsyncpa [#allocation3], 0
    %13 = vsyncpa [#allocation6], 0
    %14 = vsyncpa [#allocation9], 0
    %15 = vsyncpa [#allocation4], 0
    // Predicated region
    $region2: #{tpu_custom_call.1} parent=1 // pred_check
      _
    $region3: #{tpu_custom_call.1} parent=1 // pred_check_branch
      %17 = sbr.rel (0) target = $region5
    $region4: #{tpu_custom_call.1} parent=1 // pred_region
      %19 = vsyncadd [#allocation3], 0
      %s21 = sshll.u32 %s0, 4
      %s22 = int_to_ptr.hbm [resolvable:$true] %s21
      %s23 = sshll.u32 [#allocation2], 4
      %s24 = int_to_ptr.vmem [resolvable:$true] %s23
      %26 = dma.hbm_to_vmem [thread:$0]  %s22, 128, %s24, [#allocation3]
    $region5: #{tpu_custom_call.1} parent=1 // pred_fallthru
      _
    // Predicated region
    $region6: #{tpu_custom_call.1} parent=1 // pred_check
      _
    $region7: #{tpu_custom_call.1} parent=1 // pred_check_branch
      %28 = sbr.rel (0) target = $region9
    $region8: #{tpu_custom_call.1} parent=1 // pred_region
      %30 = vsyncadd [#allocation6], 0
      %s31 = sshll.u32 %s1, 4
      %s32 = int_to_ptr.hbm [resolvable:$true] %s31
      %s33 = sshll.u32 [#allocation5], 4
      %s34 = int_to_ptr.vmem [resolvable:$true] %s33
      %39 = dma.hbm_to_vmem [thread:$0]  %s32, 2048, %s34, [#allocation6], 128, 128, 8
    $region9: #{tpu_custom_call.1} parent=1 // pred_fallthru
      _
    // Predicated region
    $region10: #{tpu_custom_call.1} parent=1 // pred_check
      _
    $region11: #{tpu_custom_call.1} parent=1 // pred_check_branch
      %41 = sbr.rel (0) target = $region13
    $region12: #{tpu_custom_call.1} parent=1 // pred_region
      _
    $region13: #{tpu_custom_call.1} parent=1 // pred_fallthru
      _
    // Predicated region
    $region14: #{tpu_custom_call.1} parent=1 // pred_check
      _
    $region15: #{tpu_custom_call.1} parent=1 // pred_check_branch
      %43 = sbr.rel (0) target = $region17
    $region16: #{tpu_custom_call.1} parent=1 // pred_region
      %45 = vsyncadd [#allocation6], 0
      %s46 = sshll.u32 %s3, 4
      %s47 = int_to_ptr.hbm [resolvable:$true] %s46
      %s48 = sshll.u32 [#allocation7], 4
      %s49 = int_to_ptr.vmem [resolvable:$true] %s48
      %54 = dma.hbm_to_vmem [thread:$0]  %s47, 2048, %s49, [#allocation6], 128, 128, 8
    $region17: #{tpu_custom_call.1} parent=1 // pred_fallthru
      _
    // Predicated region
    $region18: #{tpu_custom_call.1} parent=1 // pred_check
      _
    $region19: #{tpu_custom_call.1} parent=1 // pred_check_branch
      %56 = sbr.rel (0) target = $region21
    $region20: #{tpu_custom_call.1} parent=1 // pred_region
      _
    $region21: #{tpu_custom_call.1} parent=1 // pred_fallthru
      _
    // Predicated region
    $region22: #{tpu_custom_call.1} parent=1 // pred_check
      _
    $region23: #{tpu_custom_call.1} parent=1 // pred_check_branch
      %58 = sbr.rel (0) target = $region25
    $region24: #{tpu_custom_call.1} parent=1 // pred_region
      %60 = vsyncadd [#allocation9], 0
      %s61 = sshll.u32 %s5, 4
      %s62 = int_to_ptr.hbm [resolvable:$true] %s61
      %s63 = sshll.u32 [#allocation8], 4
      %s64 = int_to_ptr.vmem [resolvable:$true] %s63
      %69 = dma.hbm_to_vmem [thread:$0]  %s62, 2048, %s64, [#allocation9], 128, 128, 8
    $region25: #{tpu_custom_call.1} parent=1 // pred_fallthru
      _
    // Predicated region
    $region26: #{tpu_custom_call.1} parent=1 // pred_check
      _
    $region27: #{tpu_custom_call.1} parent=1 // pred_check_branch
      %71 = sbr.rel (0) target = $region29
    $region28: #{tpu_custom_call.1} parent=1 // pred_region
      _
    $region29: #{tpu_custom_call.1} parent=1 // pred_fallthru
      _
    // Predicated region
    $region30: #{tpu_custom_call.1} parent=1 // pred_check
      _
    $region31: #{tpu_custom_call.1} parent=1 // pred_check_branch
      %73 = sbr.rel (0) target = $region33
    $region32: #{tpu_custom_call.1} parent=1 // pred_region
      %75 = dma.done [#allocation3], 128
    $region33: #{tpu_custom_call.1} parent=1 // pred_fallthru
      _
    // Predicated region
    $region34: #{tpu_custom_call.1} parent=1 // pred_check
      _
    $region35: #{tpu_custom_call.1} parent=1 // pred_check_branch
      %77 = sbr.rel (0) target = $region37
    $region36: #{tpu_custom_call.1} parent=1 // pred_region
      %79 = dma.done [#allocation6], 2048
    $region37: #{tpu_custom_call.1} parent=1 // pred_fallthru
      _
    // Predicated region
    $region38: #{tpu_custom_call.1} parent=1 // pred_check
      _
    $region39: #{tpu_custom_call.1} parent=1 // pred_check_branch
      %81 = sbr.rel (0) target = $region41
    $region40: #{tpu_custom_call.1} parent=1 // pred_region
      %83 = dma.done [#allocation6], 2048
    $region41: #{tpu_custom_call.1} parent=1 // pred_fallthru
      _
    // Predicated region
    $region42: #{tpu_custom_call.1} parent=1 // pred_check
      _
    $region43: #{tpu_custom_call.1} parent=1 // pred_check_branch
      %85 = sbr.rel (0) target = $region45
    $region44: #{tpu_custom_call.1} parent=1 // pred_region
      %87 = dma.done [#allocation9], 2048
    $region45: #{tpu_custom_call.1} parent=1 // pred_fallthru
      _
    %v88 = vld [vmem:[#allocation2] sm:$0xff]
    %v89 = vld [vmem:[#allocation5] sm:$0xff]
    %v90 = vld [vmem:[#allocation5 + $0x8] sm:$0xff]
    %v91 = vld [vmem:[#allocation5 + $0x10] sm:$0xff]
    %v92 = vld [vmem:[#allocation5 + $0x18] sm:$0xff]
    %v93 = vld [vmem:[#allocation5 + $0x20] sm:$0xff]
    %v94 = vld [vmem:[#allocation5 + $0x28] sm:$0xff]
    %v95 = vld [vmem:[#allocation5 + $0x30] sm:$0xff]
    %v96 = vld [vmem:[#allocation5 + $0x38] sm:$0xff]
    %v97 = vld [vmem:[#allocation5 + $0x40] sm:$0xff]
    %v98 = vld [vmem:[#allocation5 + $0x48] sm:$0xff]
    %v99 = vld [vmem:[#allocation5 + $0x50] sm:$0xff]
    %v100 = vld [vmem:[#allocation5 + $0x58] sm:$0xff]
    %v101 = vld [vmem:[#allocation5 + $0x60] sm:$0xff]
    %v102 = vld [vmem:[#allocation5 + $0x68] sm:$0xff]
    %v103 = vld [vmem:[#allocation5 + $0x70] sm:$0xff]
    %v104 = vld [vmem:[#allocation5 + $0x78] sm:$0xff]
    %v105 = vld [vmem:[%s2] sm:$0x1]
    %v107 = vperm.slane %v105, 0
    %109 = vmatpush.msra.mxu0 %v104
    %110 = vmatpush.msra.mxu0 %v103
    %111 = vmatpush.msra.mxu0 %v102
    %112 = vmatpush.msra.mxu0 %v101
    %113 = vmatpush.msra.mxu0 %v100
    %114 = vmatpush.msra.mxu0 %v99
    %115 = vmatpush.msra.mxu0 %v98
    %116 = vmatpush.msra.mxu0 %v97
    %117 = vmatpush.msra.mxu0 %v96
    %118 = vmatpush.msra.mxu0 %v95
    %119 = vmatpush.msra.mxu0 %v94
    %120 = vmatpush.msra.mxu0 %v93
    %121 = vmatpush.msra.mxu0 %v92
    %122 = vmatpush.msra.mxu0 %v91
    %123 = vmatpush.msra.mxu0 %v90
    %124 = vmatpush.msra.mxu0 %v89
    %125 = vmatmul.f32.gmra.mxu0 %v88
    %v126 = vpop.f32.mrf.mxu0
    %v127 = vadd.f32 %v107, %v126
    %128 = vdwg.mxu0
    %v129 = vmax.f32 %v127, 0.0
    %v130 = vld [vmem:[#allocation7] sm:$0xff]
    %v131 = vld [vmem:[#allocation7 + $0x8] sm:$0xff]
    %v132 = vld [vmem:[#allocation7 + $0x10] sm:$0xff]
    %v133 = vld [vmem:[#allocation7 + $0x18] sm:$0xff]
    %v134 = vld [vmem:[#allocation7 + $0x20] sm:$0xff]
    %v135 = vld [vmem:[#allocation7 + $0x28] sm:$0xff]
    %v136 = vld [vmem:[#allocation7 + $0x30] sm:$0xff]
    %v137 = vld [vmem:[#allocation7 + $0x38] sm:$0xff]
    %v138 = vld [vmem:[#allocation7 + $0x40] sm:$0xff]
    %v139 = vld [vmem:[#allocation7 + $0x48] sm:$0xff]
    %v140 = vld [vmem:[#allocation7 + $0x50] sm:$0xff]
    %v141 = vld [vmem:[#allocation7 + $0x58] sm:$0xff]
    %v142 = vld [vmem:[#allocation7 + $0x60] sm:$0xff]
    %v143 = vld [vmem:[#allocation7 + $0x68] sm:$0xff]
    %v144 = vld [vmem:[#allocation7 + $0x70] sm:$0xff]
    %v145 = vld [vmem:[#allocation7 + $0x78] sm:$0xff]
    %v146 = vld [vmem:[%s4] sm:$0x1]
    %v148 = vperm.slane %v146, 0
    %150 = vmatpush.msra.mxu0 %v145
    %151 = vmatpush.msra.mxu0 %v144
    %152 = vmatpush.msra.mxu0 %v143
    %153 = vmatpush.msra.mxu0 %v142
    %154 = vmatpush.msra.mxu0 %v141
    %155 = vmatpush.msra.mxu0 %v140
    %156 = vmatpush.msra.mxu0 %v139
    %157 = vmatpush.msra.mxu0 %v138
    %158 = vmatpush.msra.mxu0 %v137
    %159 = vmatpush.msra.mxu0 %v136
    %160 = vmatpush.msra.mxu0 %v135
    %161 = vmatpush.msra.mxu0 %v134
    %162 = vmatpush.msra.mxu0 %v133
    %163 = vmatpush.msra.mxu0 %v132
    %164 = vmatpush.msra.mxu0 %v131
    %165 = vmatpush.msra.mxu0 %v130
    %166 = vmatmul.f32.gmra.mxu0 %v129
    %v167 = vpop.f32.mrf.mxu0
    %v168 = vadd.f32 %v148, %v167
    %169 = vdwg.mxu0
    %v170 = vmax.f32 %v168, 0.0
    %v171 = vld [vmem:[#allocation8] sm:$0xff]
    %v172 = vld [vmem:[#allocation8 + $0x8] sm:$0xff]
    %v173 = vld [vmem:[#allocation8 + $0x10] sm:$0xff]
    %v174 = vld [vmem:[#allocation8 + $0x18] sm:$0xff]
    %v175 = vld [vmem:[#allocation8 + $0x20] sm:$0xff]
    %v176 = vld [vmem:[#allocation8 + $0x28] sm:$0xff]
    %v177 = vld [vmem:[#allocation8 + $0x30] sm:$0xff]
    %v178 = vld [vmem:[#allocation8 + $0x38] sm:$0xff]
    %v179 = vld [vmem:[#allocation8 + $0x40] sm:$0xff]
    %v180 = vld [vmem:[#allocation8 + $0x48] sm:$0xff]
    %v181 = vld [vmem:[#allocation8 + $0x50] sm:$0xff]
    %v182 = vld [vmem:[#allocation8 + $0x58] sm:$0xff]
    %v183 = vld [vmem:[#allocation8 + $0x60] sm:$0xff]
    %v184 = vld [vmem:[#allocation8 + $0x68] sm:$0xff]
    %v185 = vld [vmem:[#allocation8 + $0x70] sm:$0xff]
    %v186 = vld [vmem:[#allocation8 + $0x78] sm:$0xff]
    %v187 = vld [vmem:[%s6] sm:$0x1]
    %v189 = vperm.slane %v187, 0
    %191 = vmatpush.msra.mxu0 %v186
    %192 = vmatpush.msra.mxu0 %v185
    %193 = vmatpush.msra.mxu0 %v184
    %194 = vmatpush.msra.mxu0 %v183
    %195 = vmatpush.msra.mxu0 %v182
    %196 = vmatpush.msra.mxu0 %v181
    %197 = vmatpush.msra.mxu0 %v180
    %198 = vmatpush.msra.mxu0 %v179
    %199 = vmatpush.msra.mxu0 %v178
    %200 = vmatpush.msra.mxu0 %v177
    %201 = vmatpush.msra.mxu0 %v176
    %202 = vmatpush.msra.mxu0 %v175
    %203 = vmatpush.msra.mxu0 %v174
    %204 = vmatpush.msra.mxu0 %v173
    %205 = vmatpush.msra.mxu0 %v172
    %206 = vmatpush.msra.mxu0 %v171
    %207 = vmatmul.f32.gmra.mxu0 %v170
    %v208 = vpop.f32.mrf.mxu0
    %v209 = vadd.f32 %v189, %v208
    %210 = vdwg.mxu0
    %v211 = vmax.f32 %v209, 0.0
    %212 = vst [vmem:[#allocation10] sm:$0xff] %v211
    // Predicated region
    $region46: #{tpu_custom_call.1} parent=1 // pred_check
      _
    $region47: #{tpu_custom_call.1} parent=1 // pred_check_branch
      %214 = sbr.rel (0) target = $region49
    $region48: #{tpu_custom_call.1} parent=1 // pred_region
      %216 = vsyncadd [#allocation4], 0
      %s218 = sshll.u32 [#allocation10], 4
      %s219 = int_to_ptr.vmem [resolvable:$true] %s218
      %s220 = sshll.u32 %s7, 4
      %s221 = int_to_ptr.hbm [resolvable:$true] %s220
      %223 = dma.vmem_to_hbm [thread:$0]  %s219, 128, %s221, [#allocation4]
    $region49: #{tpu_custom_call.1} parent=1 // pred_fallthru
      _
    // Predicated region
    $region50: #{tpu_custom_call.1} parent=1 // pred_check
      _
    $region51: #{tpu_custom_call.1} parent=1 // pred_check_branch
      %225 = sbr.rel (0) target = $region53
    $region52: #{tpu_custom_call.1} parent=1 // pred_region
      %227 = dma.done [#allocation4], 128
    $region53: #{tpu_custom_call.1} parent=1 // pred_fallthru
      _
    %228 = vsyncpa [#allocation3], 1
    %229 = vsyncpa [#allocation6], 1
    %230 = vsyncpa [#allocation9], 1
    %231 = vsyncpa [#allocation4], 1

// kernel: tpu_custom_call.1
$region0: #{tpu_custom_call.1}
  #allocation0 [shape = 'u32[]', space=smem, size = 0x4, offset = 0x4, fixed_abs, tag = 'smem constant byte address 0x4 - core index']
  #allocation1 [shape = 'u32[72,128]{1,0:T(1,128)}', space=vmem, size = 0x9000, scoped, tag = 'internal scratch']
  %s0 = inlined_call_operand.hbm [shape: f32[8,128], index: 0, kind: input, shape index: {}]
  %s1 = inlined_call_operand.hbm [shape: f32[128,128], index: 1, kind: input, shape index: {}]
  %s2 = inlined_call_operand.vmem [shape: f32[1,128], index: 2, kind: input, shape index: {}]
  %s3 = inlined_call_operand.hbm [shape: f32[128,128], index: 3, kind: input, shape index: {}]
  %s4 = inlined_call_operand.vmem [shape: f32[1,128], index: 4, kind: input, shape index: {}]
  %s5 = inlined_call_operand.hbm [shape: f32[128,128], index: 5, kind: input, shape index: {}]
  %s6 = inlined_call_operand.vmem [shape: f32[1,128], index: 6, kind: input, shape index: {}]
  %s7 = inlined_call_operand.hbm [shape: f32[8,128], index: 7, kind: output, shape index: {}]
  %s8 = sld [smem:[#allocation0]]
  $region54: #{tpu_custom_call.1} parent=0
    _
  %s10 = ssub.s32 1, %s8
  %s11 = scalar_select 0, %s10, %s8
  $region1: #{tpu_custom_call.1} parent=0
    #allocation2 [shape = 'u8[4096]{0}', space=vmem, size = 0x1000, scoped, tag = 'input window, operand 0, single buffered']
    #allocation3 [shape = 's32[1]{0}', space=sflag, size = 0x4, scoped, tag = 'scoped memory for tpu_custom_call.1']
    #allocation4 [shape = 's32[1]{0}', space=sflag, size = 0x4, scoped, tag = 'scoped memory for tpu_custom_call.1']
    #allocation5 [shape = 'u8[65536]{0}', space=vmem, size = 0x10000, scoped, tag = 'input window, operand 1, single buffered']
    #allocation6 [shape = 's32[1]{0}', space=sflag, size = 0x4, scoped, tag = 'scoped memory for tpu_custom_call.1']
    #allocation7 [shape = 'u8[65536]{0}', space=vmem, size = 0x10000, scoped, tag = 'input window, operand 3, single buffered']
    #allocation8 [shape = 'u8[65536]{0}', space=vmem, size = 0x10000, scoped, tag = 'input window, operand 5, single buffered']
    #allocation9 [shape = 's32[1]{0}', space=sflag, size = 0x4, scoped, tag = 'scoped memory for tpu_custom_call.1']
    #allocation10 [shape = 'u8[4096]{0}', space=vmem, size = 0x1000, scoped, tag = 'output window, operand 0, single buffered']
    %12 = vsyncpa [#allocation3], 0
    %13 = vsyncpa [#allocation6], 0
    %14 = vsyncpa [#allocation9], 0
    %15 = vsyncpa [#allocation4], 0
    // Predicated region
    $region2: #{tpu_custom_call.1} parent=1 // pred_check
      _
    $region3: #{tpu_custom_call.1} parent=1 // pred_check_branch
      %17 = sbr.rel (0) target = $region5
    $region4: #{tpu_custom_call.1} parent=1 // pred_region
      %19 = vsyncadd [#allocation3], 0
      %s21 = sshll.u32 %s0, 4
      %s22 = int_to_ptr.hbm [resolvable:$true] %s21
      %s23 = sshll.u32 [#allocation2], 4
      %s24 = int_to_ptr.vmem [resolvable:$true] %s23
      %26 = dma.hbm_to_vmem [thread:$0]  %s22, 128, %s24, [#allocation3]
    $region5: #{tpu_custom_call.1} parent=1 // pred_fallthru
      _
    // Predicated region
    $region6: #{tpu_custom_call.1} parent=1 // pred_check
      _
    $region7: #{tpu_custom_call.1} parent=1 // pred_check_branch
      %28 = sbr.rel (0) target = $region9
    $region8: #{tpu_custom_call.1} parent=1 // pred_region
      %30 = vsyncadd [#allocation6], 0
      %s31 = sshll.u32 %s1, 4
      %s32 = int_to_ptr.hbm [resolvable:$true] %s31
      %s33 = sshll.u32 [#allocation5], 4
      %s34 = int_to_ptr.vmem [resolvable:$true] %s33
      %39 = dma.hbm_to_vmem [thread:$0]  %s32, 2048, %s34, [#allocation6], 128, 128, 8
    $region9: #{tpu_custom_call.1} parent=1 // pred_fallthru
      _
    // Predicated region
    $region10: #{tpu_custom_call.1} parent=1 // pred_check
      _
    $region11: #{tpu_custom_call.1} parent=1 // pred_check_branch
      %41 = sbr.rel (0) target = $region13
    $region12: #{tpu_custom_call.1} parent=1 // pred_region
      _
    $region13: #{tpu_custom_call.1} parent=1 // pred_fallthru
      _
    // Predicated region
    $region14: #{tpu_custom_call.1} parent=1 // pred_check
      _
    $region15: #{tpu_custom_call.1} parent=1 // pred_check_branch
      %43 = sbr.rel (0) target = $region17
    $region16: #{tpu_custom_call.1} parent=1 // pred_region
      %45 = vsyncadd [#allocation6], 0
      %s46 = sshll.u32 %s3, 4
      %s47 = int_to_ptr.hbm [resolvable:$true] %s46
      %s48 = sshll.u32 [#allocation7], 4
      %s49 = int_to_ptr.vmem [resolvable:$true] %s48
      %54 = dma.hbm_to_vmem [thread:$0]  %s47, 2048, %s49, [#allocation6], 128, 128, 8
    $region17: #{tpu_custom_call.1} parent=1 // pred_fallthru
      _
    // Predicated region
    $region18: #{tpu_custom_call.1} parent=1 // pred_check
      _
    $region19: #{tpu_custom_call.1} parent=1 // pred_check_branch
      %56 = sbr.rel (0) target = $region21
    $region20: #{tpu_custom_call.1} parent=1 // pred_region
      _
    $region21: #{tpu_custom_call.1} parent=1 // pred_fallthru
      _
    // Predicated region
    $region22: #{tpu_custom_call.1} parent=1 // pred_check
      _
    $region23: #{tpu_custom_call.1} parent=1 // pred_check_branch
      %58 = sbr.rel (0) target = $region25
    $region24: #{tpu_custom_call.1} parent=1 // pred_region
      %60 = vsyncadd [#allocation9], 0
      %s61 = sshll.u32 %s5, 4
      %s62 = int_to_ptr.hbm [resolvable:$true] %s61
      %s63 = sshll.u32 [#allocation8], 4
      %s64 = int_to_ptr.vmem [resolvable:$true] %s63
      %69 = dma.hbm_to_vmem [thread:$0]  %s62, 2048, %s64, [#allocation9], 128, 128, 8
    $region25: #{tpu_custom_call.1} parent=1 // pred_fallthru
      _
    // Predicated region
    $region26: #{tpu_custom_call.1} parent=1 // pred_check
      _
    $region27: #{tpu_custom_call.1} parent=1 // pred_check_branch
      %71 = sbr.rel (0) target = $region29
    $region28: #{tpu_custom_call.1} parent=1 // pred_region
      _
    $region29: #{tpu_custom_call.1} parent=1 // pred_fallthru
      _
    // Predicated region
    $region30: #{tpu_custom_call.1} parent=1 // pred_check
      _
    $region31: #{tpu_custom_call.1} parent=1 // pred_check_branch
      %73 = sbr.rel (0) target = $region33
    $region32: #{tpu_custom_call.1} parent=1 // pred_region
      %75 = dma.done [#allocation3], 128
    $region33: #{tpu_custom_call.1} parent=1 // pred_fallthru
      _
    // Predicated region
    $region34: #{tpu_custom_call.1} parent=1 // pred_check
      _
    $region35: #{tpu_custom_call.1} parent=1 // pred_check_branch
      %77 = sbr.rel (0) target = $region37
    $region36: #{tpu_custom_call.1} parent=1 // pred_region
      %79 = dma.done [#allocation6], 2048
    $region37: #{tpu_custom_call.1} parent=1 // pred_fallthru
      _
    // Predicated region
    $region38: #{tpu_custom_call.1} parent=1 // pred_check
      _
    $region39: #{tpu_custom_call.1} parent=1 // pred_check_branch
      %81 = sbr.rel (0) target = $region41
    $region40: #{tpu_custom_call.1} parent=1 // pred_region
      %83 = dma.done [#allocation6], 2048
    $region41: #{tpu_custom_call.1} parent=1 // pred_fallthru
      _
    // Predicated region
    $region42: #{tpu_custom_call.1} parent=1 // pred_check
      _
    $region43: #{tpu_custom_call.1} parent=1 // pred_check_branch
      %85 = sbr.rel (0) target = $region45
    $region44: #{tpu_custom_call.1} parent=1 // pred_region
      %87 = dma.done [#allocation9], 2048
    $region45: #{tpu_custom_call.1} parent=1 // pred_fallthru
      _
    %v88 = vld [vmem:[#allocation2] sm:$0xff]
    %v89 = vld [vmem:[#allocation5] sm:$0xff]
    %v90 = vld [vmem:[#allocation5 + $0x8] sm:$0xff]
    %v91 = vld [vmem:[#allocation5 + $0x10] sm:$0xff]
    %v92 = vld [vmem:[#allocation5 + $0x18] sm:$0xff]
    %v93 = vld [vmem:[#allocation5 + $0x20] sm:$0xff]
    %v94 = vld [vmem:[#allocation5 + $0x28] sm:$0xff]
    %v95 = vld [vmem:[#allocation5 + $0x30] sm:$0xff]
    %v96 = vld [vmem:[#allocation5 + $0x38] sm:$0xff]
    %v97 = vld [vmem:[#allocation5 + $0x40] sm:$0xff]
    %v98 = vld [vmem:[#allocation5 + $0x48] sm:$0xff]
    %v99 = vld [vmem:[#allocation5 + $0x50] sm:$0xff]
    %v100 = vld [vmem:[#allocation5 + $0x58] sm:$0xff]
    %v101 = vld [vmem:[#allocation5 + $0x60] sm:$0xff]
    %v102 = vld [vmem:[#allocation5 + $0x68] sm:$0xff]
    %v103 = vld [vmem:[#allocation5 + $0x70] sm:$0xff]
    %v104 = vld [vmem:[#allocation5 + $0x78] sm:$0xff]
    %v105 = vld [vmem:[%s2] sm:$0x1]
    %v107 = vperm.slane %v105, 0
    %109 = vmatpush.msra.mxu0 %v104
    %110 = vmatpush.msra.mxu0 %v103
    %111 = vmatpush.msra.mxu0 %v102
    %112 = vmatpush.msra.mxu0 %v101
    %113 = vmatpush.msra.mxu0 %v100
    %114 = vmatpush.msra.mxu0 %v99
    %115 = vmatpush.msra.mxu0 %v98
    %116 = vmatpush.msra.mxu0 %v97
    %117 = vmatpush.msra.mxu0 %v96
    %118 = vmatpush.msra.mxu0 %v95
    %119 = vmatpush.msra.mxu0 %v94
    %120 = vmatpush.msra.mxu0 %v93
    %121 = vmatpush.msra.mxu0 %v92
    %122 = vmatpush.msra.mxu0 %v91
    %123 = vmatpush.msra.mxu0 %v90
    %124 = vmatpush.msra.mxu0 %v89
    %125 = vmatmul.f32.gmra.mxu0 %v88
    %v126 = vpop.f32.mrf.mxu0
    %v127 = vadd.f32 %v107, %v126
    %128 = vdwg.mxu0
    %v129 = vmax.f32 %v127, 0.0
    %v130 = vld [vmem:[#allocation7] sm:$0xff]
    %v131 = vld [vmem:[#allocation7 + $0x8] sm:$0xff]
    %v132 = vld [vmem:[#allocation7 + $0x10] sm:$0xff]
    %v133 = vld [vmem:[#allocation7 + $0x18] sm:$0xff]
    %v134 = vld [vmem:[#allocation7 + $0x20] sm:$0xff]
    %v135 = vld [vmem:[#allocation7 + $0x28] sm:$0xff]
    %v136 = vld [vmem:[#allocation7 + $0x30] sm:$0xff]
    %v137 = vld [vmem:[#allocation7 + $0x38] sm:$0xff]
    %v138 = vld [vmem:[#allocation7 + $0x40] sm:$0xff]
    %v139 = vld [vmem:[#allocation7 + $0x48] sm:$0xff]
    %v140 = vld [vmem:[#allocation7 + $0x50] sm:$0xff]
    %v141 = vld [vmem:[#allocation7 + $0x58] sm:$0xff]
    %v142 = vld [vmem:[#allocation7 + $0x60] sm:$0xff]
    %v143 = vld [vmem:[#allocation7 + $0x68] sm:$0xff]
    %v144 = vld [vmem:[#allocation7 + $0x70] sm:$0xff]
    %v145 = vld [vmem:[#allocation7 + $0x78] sm:$0xff]
    %v146 = vld [vmem:[%s4] sm:$0x1]
    %v148 = vperm.slane %v146, 0
    %150 = vmatpush.msra.mxu0 %v145
    %151 = vmatpush.msra.mxu0 %v144
    %152 = vmatpush.msra.mxu0 %v143
    %153 = vmatpush.msra.mxu0 %v142
    %154 = vmatpush.msra.mxu0 %v141
    %155 = vmatpush.msra.mxu0 %v140
    %156 = vmatpush.msra.mxu0 %v139
    %157 = vmatpush.msra.mxu0 %v138
    %158 = vmatpush.msra.mxu0 %v137
    %159 = vmatpush.msra.mxu0 %v136
    %160 = vmatpush.msra.mxu0 %v135
    %161 = vmatpush.msra.mxu0 %v134
    %162 = vmatpush.msra.mxu0 %v133
    %163 = vmatpush.msra.mxu0 %v132
    %164 = vmatpush.msra.mxu0 %v131
    %165 = vmatpush.msra.mxu0 %v130
    %166 = vmatmul.f32.gmra.mxu0 %v129
    %v167 = vpop.f32.mrf.mxu0
    %v168 = vadd.f32 %v148, %v167
    %169 = vdwg.mxu0
    %v170 = vmax.f32 %v168, 0.0
    %v171 = vld [vmem:[#allocation8] sm:$0xff]
    %v172 = vld [vmem:[#allocation8 + $0x8] sm:$0xff]
    %v173 = vld [vmem:[#allocation8 + $0x10] sm:$0xff]
    %v174 = vld [vmem:[#allocation8 + $0x18] sm:$0xff]
    %v175 = vld [vmem:[#allocation8 + $0x20] sm:$0xff]
    %v176 = vld [vmem:[#allocation8 + $0x28] sm:$0xff]
    %v177 = vld [vmem:[#allocation8 + $0x30] sm:$0xff]
    %v178 = vld [vmem:[#allocation8 + $0x38] sm:$0xff]
    %v179 = vld [vmem:[#allocation8 + $0x40] sm:$0xff]
    %v180 = vld [vmem:[#allocation8 + $0x48] sm:$0xff]
    %v181 = vld [vmem:[#allocation8 + $0x50] sm:$0xff]
    %v182 = vld [vmem:[#allocation8 + $0x58] sm:$0xff]
    %v183 = vld [vmem:[#allocation8 + $0x60] sm:$0xff]
    %v184 = vld [vmem:[#allocation8 + $0x68] sm:$0xff]
    %v185 = vld [vmem:[#allocation8 + $0x70] sm:$0xff]
    %v186 = vld [vmem:[#allocation8 + $0x78] sm:$0xff]
    %v187 = vld [vmem:[%s6] sm:$0x1]
    %v189 = vperm.slane %v187, 0
    %191 = vmatpush.msra.mxu0 %v186
    %192 = vmatpush.msra.mxu0 %v185
    %193 = vmatpush.msra.mxu0 %v184
    %194 = vmatpush.msra.mxu0 %v183
    %195 = vmatpush.msra.mxu0 %v182
    %196 = vmatpush.msra.mxu0 %v181
    %197 = vmatpush.msra.mxu0 %v180
    %198 = vmatpush.msra.mxu0 %v179
    %199 = vmatpush.msra.mxu0 %v178
    %200 = vmatpush.msra.mxu0 %v177
    %201 = vmatpush.msra.mxu0 %v176
    %202 = vmatpush.msra.mxu0 %v175
    %203 = vmatpush.msra.mxu0 %v174
    %204 = vmatpush.msra.mxu0 %v173
    %205 = vmatpush.msra.mxu0 %v172
    %206 = vmatpush.msra.mxu0 %v171
    %207 = vmatmul.f32.gmra.mxu0 %v170
    %v208 = vpop.f32.mrf.mxu0
    %v209 = vadd.f32 %v189, %v208
    %210 = vdwg.mxu0
    %v211 = vmax.f32 %v209, 0.0
    %212 = vst [vmem:[#allocation10] sm:$0xff] %v211
    // Predicated region
    $region46: #{tpu_custom_call.1} parent=1 // pred_check
      _
    $region47: #{tpu_custom_call.1} parent=1 // pred_check_branch
      %214 = sbr.rel (0) target = $region49
    $region48: #{tpu_custom_call.1} parent=1 // pred_region
      %216 = vsyncadd [#allocation4], 0
      %s218 = sshll.u32 [#allocation10], 4
      %s219 = int_to_ptr.vmem [resolvable:$true] %s218
      %s220 = sshll.u32 %s7, 4
      %s221 = int_to_ptr.hbm [resolvable:$true] %s220
      %223 = dma.vmem_to_hbm [thread:$0]  %s219, 128, %s221, [#allocation4]
    $region49: #{tpu_custom_call.1} parent=1 // pred_fallthru
      _
    // Predicated region
    $region50: #{tpu_custom_call.1} parent=1 // pred_check
      _
    $region51: #{tpu_custom_call.1} parent=1 // pred_check_branch
      %225 = sbr.rel (0) target = $region53
    $region52: #{tpu_custom_call.1} parent=1 // pred_region
      %227 = dma.done [#allocation4], 128
    $region53: #{tpu_custom_call.1} parent=1 // pred_fallthru
      _
    %228 = vsyncpa [#allocation3], 1
    %229 = vsyncpa [#allocation6], 1
    %230 = vsyncpa [#allocation9], 1
    %231 = vsyncpa [#allocation4], 1

</llo_original>
